<compile_context>
chip_gen: v5e
topology: v5e:2x2
jax: 0.10.0
libtpu: 0.0.40
codegen_flags: <defaults>
</compile_context>

<pallas_src>
import functools
import math

import jax
import jax.numpy as jnp
from jax.experimental import pallas as pl
from jax.experimental.pallas import tpu as pltpu

N_HEAD = 8  # every UNET_AttentionBlock in the reference is built with n_head=8


def _round_up(x, m):
    return (x + m - 1) // m * m


# ------------------------------ tiling helpers -------------------------------
def _pad_k(k):
    kp = _round_up(k, 128)
    if kp <= 1024:
        return kp
    if kp > 8192:
        return _round_up(kp, 1024)
    return _round_up(kp, 512)


def _pick_bk(kp):
    if kp <= 1024:
        return kp
    return 1024 if kp % 1024 == 0 else 512


def _pick_bn(np_):
    for cand in (512, 256):
        if np_ % cand == 0:
            return cand
    return 128


_MM_PARAMS = pltpu.CompilerParams(
    dimension_semantics=("parallel", "parallel", "arbitrary"),
    vmem_limit_bytes=48 * 1024 * 1024,
)
_EW_PARAMS = pltpu.CompilerParams(dimension_semantics=("parallel",))


# ----------------------------------------------------------------------------
# Pallas kernel 1: tiled bf16 GEMM + bias (+ optional fused residual add)
# ----------------------------------------------------------------------------
def _matmul_bias_kernel(a_ref, b_ref, bias_ref, o_ref, acc_ref):
    @pl.when(pl.program_id(2) == 0)
    def _():
        acc_ref[...] = jnp.zeros_like(acc_ref)

    acc_ref[...] += jnp.dot(a_ref[...], b_ref[...],
                            preferred_element_type=jnp.float32)

    @pl.when(pl.program_id(2) == pl.num_programs(2) - 1)
    def _():
        o_ref[...] = acc_ref[...] + bias_ref[...]


def _matmul_bias_res_kernel(a_ref, b_ref, bias_ref, r_ref, o_ref, acc_ref):
    @pl.when(pl.program_id(2) == 0)
    def _():
        acc_ref[...] = jnp.zeros_like(acc_ref)

    acc_ref[...] += jnp.dot(a_ref[...], b_ref[...],
                            preferred_element_type=jnp.float32)

    @pl.when(pl.program_id(2) == pl.num_programs(2) - 1)
    def _():
        o_ref[...] = acc_ref[...] + bias_ref[...] + r_ref[...]


def matmul(a, lin, residual=None):
    """(M, K) fp32 activation @ pre-padded bf16 weight + bias [+ residual]."""
    w, b = lin["w"], lin["b"]                     # w: (Kp, Np) bf16, b: (1, N)
    m, k = a.shape
    kp, np_ = w.shape
    n_out = b.shape[1]
    bk, bn = _pick_bk(kp), _pick_bn(np_)
    mp = _round_up(m, 8)
    if mp > 256:
        bm, mp = 256, _round_up(m, 256)
    else:
        bm = mp
    a_p = jnp.pad(a.astype(jnp.bfloat16), ((0, mp - m), (0, kp - k)))
    b_p = jnp.pad(b, ((0, 0), (0, np_ - n_out)))
    inputs = [a_p, w, b_p]
    in_specs = [
        pl.BlockSpec((bm, bk), lambda i, j, s: (i, s)),
        pl.BlockSpec((bk, bn), lambda i, j, s: (s, j)),
        pl.BlockSpec((1, bn), lambda i, j, s: (0, j)),
    ]
    if residual is None:
        kernel = _matmul_bias_kernel
    else:
        kernel = _matmul_bias_res_kernel
        inputs.append(jnp.pad(residual, ((0, mp - m), (0, np_ - n_out))))
        in_specs.append(pl.BlockSpec((bm, bn), lambda i, j, s: (i, j)))
    out = pl.pallas_call(
        kernel,
        out_shape=jax.ShapeDtypeStruct((mp, np_), jnp.float32),
        grid=(mp // bm, np_ // bn, kp // bk),
        in_specs=in_specs,
        out_specs=pl.BlockSpec((bm, bn), lambda i, j, s: (i, j)),
        scratch_shapes=[pltpu.VMEM((bm, bn), jnp.float32)],
        compiler_params=_MM_PARAMS,
    )(*inputs)
    return out[:m, :n_out]


# ----------------------------------------------------------------------------
# Pallas kernel 2: GroupNorm (optionally fused SiLU, optionally fused
# per-channel additive bias = time-embedding broadcast) over (group, cg, hw)
# ----------------------------------------------------------------------------
def _gn_body(x, g, b, eps, act):
    inv = 1.0 / (x.shape[1] * x.shape[2])
    mean = jnp.sum(jnp.sum(x, axis=2, keepdims=True), axis=1, keepdims=True) * inv
    xc = x - mean
    var = jnp.sum(jnp.sum(xc * xc, axis=2, keepdims=True), axis=1, keepdims=True) * inv
    y = xc * jax.lax.rsqrt(var + eps)
    y = y * g + b                                         # (gb, cg, 1) broadcast
    if act == "silu":
        y = y * jax.nn.sigmoid(y)
    return y


def _group_norm_kernel(x_ref, g_ref, b_ref, o_ref, *, eps, act):
    o_ref[...] = _gn_body(x_ref[...], g_ref[...], b_ref[...], eps, act)


def _group_norm_add_kernel(x_ref, t_ref, g_ref, b_ref, o_ref, *, eps, act):
    # t_ref: (gb, cg, 1) per-channel additive term (time embedding projection),
    # added BEFORE the normalization (matches `merged = feature + time` in ref).
    o_ref[...] = _gn_body(x_ref[...] + t_ref[...], g_ref[...], b_ref[...], eps, act)


def group_norm(x, p, eps, act="none", add_c=None):
    n, c, h, w = x.shape
    g = 32
    cg, hw = c // g, h * w
    gb = 16 if g % 16 == 0 else g
    xr = x.reshape(n * g, cg, hw)
    x_spec = pl.BlockSpec((gb, cg, hw), lambda i: (i, 0, 0))
    gamma_spec = pl.BlockSpec((gb, cg, 1), lambda i: (i % (g // gb), 0, 0))
    grid = (n * g // gb,)
    out_shape = jax.ShapeDtypeStruct((n * g, cg, hw), jnp.float32)
    if add_c is None:
        out = pl.pallas_call(
            functools.partial(_group_norm_kernel, eps=eps, act=act),
            out_shape=out_shape,
            grid=grid,
            in_specs=[x_spec, gamma_spec, gamma_spec],
            out_specs=x_spec,
            compiler_params=_EW_PARAMS,
        )(xr, p["g"], p["b"])
    else:
        tr = add_c.reshape(n * g, cg, 1)
        out = pl.pallas_call(
            functools.partial(_group_norm_add_kernel, eps=eps, act=act),
            out_shape=out_shape,
            grid=grid,
            in_specs=[x_spec,
                      pl.BlockSpec((gb, cg, 1), lambda i: (i, 0, 0)),
                      gamma_spec, gamma_spec],
            out_specs=x_spec,
            compiler_params=_EW_PARAMS,
        )(xr, tr, p["g"], p["b"])
    return out.reshape(n, c, h, w)


# ----------------------------------------------------------------------------
# Pallas kernel 3: LayerNorm over rows (gamma/beta as (1, C) blocks)
# ----------------------------------------------------------------------------
def _layer_norm_kernel(x_ref, g_ref, b_ref, o_ref, *, eps):
    x = x_ref[...]
    inv = 1.0 / x.shape[1]
    mean = jnp.sum(x, axis=1, keepdims=True) * inv
    xc = x - mean
    var = jnp.sum(xc * xc, axis=1, keepdims=True) * inv
    o_ref[...] = xc * jax.lax.rsqrt(var + eps) * g_ref[...] + b_ref[...]


def layer_norm(x3, p, eps=1e-5):
    n, s, c = x3.shape
    r = n * s
    rp = _round_up(r, 8)
    br = 128 if rp % 128 == 0 else rp
    xr = jnp.pad(x3.reshape(r, c), ((0, rp - r), (0, 0)))
    out = pl.pallas_call(
        functools.partial(_layer_norm_kernel, eps=eps),
        out_shape=jax.ShapeDtypeStruct((rp, c), jnp.float32),
        grid=(rp // br,),
        in_specs=[
            pl.BlockSpec((br, c), lambda i: (i, 0)),
            pl.BlockSpec((1, c), lambda i: (0, 0)),
            pl.BlockSpec((1, c), lambda i: (0, 0)),
        ],
        out_specs=pl.BlockSpec((br, c), lambda i: (i, 0)),
        compiler_params=_EW_PARAMS,
    )(xr, p["g"], p["b"])
    return out[:r].reshape(n, s, c)


# ----------------------------------------------------------------------------
# Pallas kernel 4: scaled-dot-product attention, one (batch*head) per step
# ----------------------------------------------------------------------------
def _attn_kernel(q_ref, k_ref, v_ref, o_ref, *, true_l, scale):
    q = q_ref[0]                                  # (Sp, Dh) bf16
    k = k_ref[0]                                  # (Lp, Dh) bf16
    v = v_ref[0]
    s = jax.lax.dot_general(q, k, (((1,), (1,)), ((), ())),
                            preferred_element_type=jnp.float32) * scale
    if true_l != k.shape[0]:                      # mask padded keys (static)
        mask = jax.lax.broadcasted_iota(jnp.int32, s.shape, 1) < true_l
        s = jnp.where(mask, s, -1e30)
    m = jnp.max(s, axis=-1, keepdims=True)
    p = jnp.exp(s - m)
    denom = jnp.sum(p, axis=-1, keepdims=True)
    o = jnp.dot(p.astype(jnp.bfloat16), v, preferred_element_type=jnp.float32)
    o_ref[0] = o * pl.reciprocal(denom, approx=True)


# TODO(synk): at real SD resolutions (S=4096) this should become an online
# softmax (flash) kernel with a KV grid axis; at these shapes the full score
# block fits trivially in VMEM.
def attention(q, k, v):
    b, s, c = q.shape
    l = k.shape[1]
    dh = c // N_HEAD
    scale = 1.0 / math.sqrt(dh)

    def heads(t, length):
        t = t.reshape(b, length, N_HEAD, dh).transpose(0, 2, 1, 3)
        return t.reshape(b * N_HEAD, length, dh).astype(jnp.bfloat16)

    sp, lp = _round_up(s, 8), _round_up(l, 8)
    qh = jnp.pad(heads(q, s), ((0, 0), (0, sp - s), (0, 0)))
    kh = jnp.pad(heads(k, l), ((0, 0), (0, lp - l), (0, 0)))
    vh = jnp.pad(heads(v, l), ((0, 0), (0, lp - l), (0, 0)))
    bh = b * N_HEAD
    o = pl.pallas_call(
        functools.partial(_attn_kernel, true_l=l, scale=scale),
        out_shape=jax.ShapeDtypeStruct((bh, sp, dh), jnp.float32),
        grid=(bh,),
        in_specs=[
            pl.BlockSpec((1, sp, dh), lambda h: (h, 0, 0)),
            pl.BlockSpec((1, lp, dh), lambda h: (h, 0, 0)),
            pl.BlockSpec((1, lp, dh), lambda h: (h, 0, 0)),
        ],
        out_specs=pl.BlockSpec((1, sp, dh), lambda h: (h, 0, 0)),
        compiler_params=_EW_PARAMS,
    )(qh, kh, vh)
    o = o[:, :s, :].reshape(b, N_HEAD, s, dh).transpose(0, 2, 1, 3)
    return o.reshape(b, s, c)


# ----------------------------------------------------------------------------
# Convolutions via im2col + Pallas GEMM (glue fused under the block-level jit)
# ----------------------------------------------------------------------------
def conv2d(x, p, ks, stride=1, residual=None):
    n, c, h, w = x.shape
    n_out = p["b"].shape[1]
    if ks == 1:
        a = jnp.transpose(x, (0, 2, 3, 1)).reshape(n * h * w, c)
        res = None
        if residual is not None:
            res = jnp.transpose(residual, (0, 2, 3, 1)).reshape(n * h * w, n_out)
        y = matmul(a, p, residual=res)
        return jnp.transpose(y.reshape(n, h, w, n_out), (0, 3, 1, 2))
    # 3x3, padding=1
    ho = (h + 2 - 3) // stride + 1
    wo = (w + 2 - 3) // stride + 1
    xp = jnp.transpose(jnp.pad(x, ((0, 0), (0, 0), (1, 1), (1, 1))), (0, 2, 3, 1))
    # TODO(synk): im2col still materializes a 9x activation tensor in HBM; at
    # large resolutions the 9 taps should be folded into the GEMM's K grid axis.
    cols = []
    for i in range(3):
        for j in range(3):
            cols.append(xp[:, i:i + (ho - 1) * stride + 1:stride,
                           j:j + (wo - 1) * stride + 1:stride, :])
    patches = jnp.stack(cols, axis=3).reshape(n * ho * wo, 9 * c)
    res = None
    if residual is not None:
        res = jnp.transpose(residual, (0, 2, 3, 1)).reshape(n * ho * wo, n_out)
    y = matmul(patches, p, residual=res)
    return jnp.transpose(y.reshape(n, ho, wo, n_out), (0, 3, 1, 2))


def upsample(x, p):
    # TODO(synk): nearest 2x upsample is materialized before the conv GEMM;
    # folding it into the patch gather would save a 4x HBM round trip.
    x = jnp.repeat(jnp.repeat(x, 2, axis=2), 2, axis=3)
    return conv2d(x, p, ks=3, stride=1)


# ----------------------------------------------------------------------------
# Blocks (residual / time adds fused into kernel epilogues where possible)
# ----------------------------------------------------------------------------
def residual_block(x, time, p):
    residue = x
    h = group_norm(x, p["gn_f"], eps=1e-5, act="silu")
    h = conv2d(h, p["conv_f"], ks=3)
    t = matmul(jax.nn.silu(time), p["lin_t"])               # (N, Cout)
    # time-embedding broadcast add fused into the merged GroupNorm+SiLU kernel
    merged = group_norm(h, p["gn_m"], eps=1e-5, act="silu", add_c=t)
    if "res_conv" in p:
        residue = conv2d(residue, p["res_conv"], ks=1)
    return conv2d(merged, p["conv_m"], ks=3, residual=residue)


def self_attention(x3, p, residual3):
    n, s, c = x3.shape
    qkv = matmul(x3.reshape(n * s, c), p["in"])
    q, k, v = jnp.split(qkv.reshape(n, s, 3 * c), 3, axis=-1)
    o = attention(q, k, v)
    return matmul(o.reshape(n * s, c), p["out"],
                  residual=residual3.reshape(n * s, c)).reshape(n, s, c)


def cross_attention(x3, context, p, residual3):
    n, s, c = x3.shape
    nc, l, dc = context.shape
    q = matmul(x3.reshape(n * s, c), p["q"]).reshape(n, s, c)
    k = matmul(context.reshape(nc * l, dc), p["k"]).reshape(nc, l, c)
    v = matmul(context.reshape(nc * l, dc), p["v"]).reshape(nc, l, c)
    o = attention(q, k, v)
    return matmul(o.reshape(n * s, c), p["out"],
                  residual=residual3.reshape(n * s, c)).reshape(n, s, c)


def attention_block(x, context, p):
    n, c, hh, ww = x.shape
    residue_long = x
    h = group_norm(x, p["gn"], eps=1e-6, act="none")
    h = conv2d(h, p["conv_in"], ks=1)
    s = hh * ww
    h = jnp.transpose(h.reshape(n, c, s), (0, 2, 1))          # (N, HW, C)

    h = self_attention(layer_norm(h, p["ln1"]), p["attn1"], residual3=h)
    h = cross_attention(layer_norm(h, p["ln2"]), context, p["attn2"], residual3=h)

    hn = layer_norm(h, p["ln3"])
    gg = matmul(hn.reshape(n * s, c), p["geglu1"])
    a_half, gate = jnp.split(gg, 2, axis=-1)
    # TODO(synk): exact erf-GELU gating kept in plain JAX (fused by XLA under
    # the block-level jit); both surrounding GEMMs run in the Pallas kernel.
    hn2 = a_half * jax.nn.gelu(gate, approximate=False)
    h = matmul(hn2, p["geglu2"], residual=h.reshape(n * s, c)).reshape(n, s, c)

    h = jnp.transpose(h, (0, 2, 1)).reshape(n, c, hh, ww)
    return conv2d(h, p["conv_out"], ks=1, residual=residue_long)


# Block-level jit: fuses all glue inside a block; identical block signatures
# (same shapes / param structure) share one compilation via the jit cache.
_residual_block = jax.jit(residual_block)
_attention_block = jax.jit(attention_block)
_conv_layer = jax.jit(conv2d, static_argnames=("ks", "stride"))
_upsample = jax.jit(upsample)


# ----------------------------------------------------------------------------
# Deterministic parameter construction (shapes from the PyTorch __init__).
# Weights are pre-reshaped, pre-padded and stored in bf16; only arrays live in
# the param pytree (static info is encoded in dict keys / call sites).
# ----------------------------------------------------------------------------
class _ParamGen:
    def __init__(self, key):
        self.key = key
        self.count = 0

    def normal(self, shape, scale):
        self.count += 1
        k = jax.random.fold_in(self.key, self.count)
        return jax.random.normal(k, shape, jnp.float32) * scale


def _pack_linear(w, n_out):
    k, n = w.shape
    kp, np_ = _pad_k(k), _round_up(n, 128)
    wp = jnp.pad(w, ((0, kp - k), (0, np_ - n))).astype(jnp.bfloat16)
    return {"w": wp, "b": jnp.zeros((1, n_out), jnp.float32)}


def init_linear(gen, fin, fout):
    return _pack_linear(gen.normal((fin, fout), 1.0 / math.sqrt(fin)), fout)


def init_conv(gen, cin, cout, ks):
    fan_in = cin * ks * ks
    w = gen.normal((ks, ks, cin, cout), 1.0 / math.sqrt(fan_in))
    return _pack_linear(w.reshape(ks * ks * cin, cout), cout)


def init_gn(c, g=32):
    cg = c // g
    return {"g": jnp.ones((g, cg, 1), jnp.float32),
            "b": jnp.zeros((g, cg, 1), jnp.float32)}


def init_ln(c):
    return {"g": jnp.ones((1, c), jnp.float32),
            "b": jnp.zeros((1, c), jnp.float32)}


def init_residual_block(gen, cin, cout, n_time=1280):
    p = {"gn_f": init_gn(cin),
         "conv_f": init_conv(gen, cin, cout, 3),
         "lin_t": init_linear(gen, n_time, cout),
         "gn_m": init_gn(cout),
         "conv_m": init_conv(gen, cout, cout, 3)}
    if cin != cout:
        p["res_conv"] = init_conv(gen, cin, cout, 1)
    return p


def init_attention_block(gen, n_head, n_embd, d_context=768):
    c = n_head * n_embd
    return {"gn": init_gn(c),
            "conv_in": init_conv(gen, c, c, 1),
            "ln1": init_ln(c),
            "attn1": {"in": init_linear(gen, c, 3 * c),   # in_proj_bias=False -> zero bias
                      "out": init_linear(gen, c, c)},
            "ln2": init_ln(c),
            "attn2": {"q": init_linear(gen, c, c),
                      "k": init_linear(gen, d_context, c),
                      "v": init_linear(gen, d_context, c),
                      "out": init_linear(gen, c, c)},
            "ln3": init_ln(c),
            "geglu1": init_linear(gen, c, 4 * c * 2),
            "geglu2": init_linear(gen, 4 * c, c),
            "conv_out": init_conv(gen, c, c, 1)}


def init_unet(gen):
    rb = lambda ci, co: {"res": init_residual_block(gen, ci, co)}
    ab = lambda nh, ne: {"attn": init_attention_block(gen, nh, ne)}
    cv = lambda ci, co: {"conv": init_conv(gen, ci, co, 3)}
    cs = lambda ci, co: {"conv_s2": init_conv(gen, ci, co, 3)}
    up = lambda ch: {"up": init_conv(gen, ch, ch, 3)}
    encoders = [
        [cv(4, 320)],
        [rb(320, 320), ab(8, 40)],
        [rb(320, 320), ab(8, 40)],
        [cs(320, 320)],
        [rb(320, 640), ab(8, 80)],
        [rb(640, 640), ab(8, 80)],
        [cs(640, 640)],
        [rb(640, 1280), ab(8, 160)],
        [rb(1280, 1280), ab(8, 160)],
        [cs(1280, 1280)],
        [rb(1280, 1280)],
        [rb(1280, 1280)],
    ]
    bottleneck = [rb(1280, 1280), ab(8, 160), rb(1280, 1280)]
    decoders = [
        [rb(2560, 1280)],
        [rb(2560, 1280)],
        [rb(2560, 1280), up(1280)],
        [rb(2560, 1280), ab(8, 160)],
        [rb(2560, 1280), ab(8, 160)],
        [rb(1920, 1280), ab(8, 160), up(1280)],
        [rb(1920, 640), ab(8, 80)],
        [rb(1280, 640), ab(8, 80)],
        [rb(960, 640), ab(8, 80), up(640)],
        [rb(960, 320), ab(8, 40)],
        [rb(640, 320), ab(8, 40)],
        [rb(640, 320), ab(8, 40)],
    ]
    return {"encoders": encoders, "bottleneck": bottleneck, "decoders": decoders}


# ----------------------------------------------------------------------------
# UNET forward
# ----------------------------------------------------------------------------
def apply_layer(kind, p, x, context, time):
    if kind == "res":
        return _residual_block(x, time, p)
    if kind == "attn":
        # TODO(synk): the reference's `attention_map` capture argument is ignored
        # (SelfAttention/CrossAttention sources not provided; standard SD attention).
        return _attention_block(x, context, p)
    if kind == "conv":
        return _conv_layer(x, p, ks=3, stride=1)
    if kind == "conv_s2":
        return _conv_layer(x, p, ks=3, stride=2)
    if kind == "up":
        return _upsample(x, p)
    raise ValueError(kind)


def unet_forward(params, x, context, time):
    skips = []
    for block in params["encoders"]:
        for layer in block:
            (kind, p), = layer.items()
            x = apply_layer(kind, p, x, context, time)
        skips.append(x)
    for layer in params["bottleneck"]:
        (kind, p), = layer.items()
        x = apply_layer(kind, p, x, context, time)
    for block in params["decoders"]:
        x = jnp.concatenate([x, skips.pop()], axis=1)
        for layer in block:
            (kind, p), = layer.items()
            x = apply_layer(kind, p, x, context, time)
    return x


if __name__ == "__main__":
    gen = _ParamGen(jax.random.PRNGKey(42))
    params = init_unet(gen)

    key = jax.random.PRNGKey(0)
    kx, kc, kt = jax.random.split(key, 3)
    x = jax.random.normal(kx, (1, 4, 16, 16), jnp.float32)       # latent, NCHW
    context = jax.random.normal(kc, (1, 8, 768), jnp.float32)    # text context
    time = jax.random.normal(kt, (1, 1280), jnp.float32)         # time embedding

    out = unet_forward(params, x, context, time)
    out = jax.block_until_ready(out)
    assert out.shape == (1, 320, 16, 16), out.shape
    print("KERNEL_OK")
</pallas_src>

<mosaic_0001>
module attributes {stable_mosaic.version = 11 : i64} {
  func.func @_matmul_bias_kernel(%arg0: i32, %arg1: i32, %arg2: i32, %arg3: memref<256x128xbf16, #tpu.memory_space<vmem>>, %arg4: memref<128x128xbf16, #tpu.memory_space<vmem>>, %arg5: memref<1x128xf32, #tpu.memory_space<vmem>>, %arg6: memref<256x128xf32, #tpu.memory_space<vmem>>, %arg7: memref<256x128xf32, #tpu.memory_space<vmem>>) attributes {dimension_semantics = [#tpu.dimension_semantics<parallel>, #tpu.dimension_semantics<parallel>, #tpu.dimension_semantics<arbitrary>], iteration_bounds = array<i64: 1, 3, 1>, scalar_prefetch = 0 : i64, scratch_operands = 1 : i64, tpu.core_type = #tpu.core_type<tc>, window_params = [{transform_indices = @transform_0, window_bounds = array<i64: 256, 128>}, {transform_indices = @transform_1, window_bounds = array<i64: 128, 128>}, {transform_indices = @transform_2, window_bounds = array<i64: 1, 128>}, {transform_indices = @transform_3, window_bounds = array<i64: 256, 128>}]} {
    %c0_i32 = arith.constant 0 : i32
    %0 = arith.cmpi eq, %arg2, %c0_i32 : i32
    %1 = arith.extui %0 : i1 to i32
    %c0_i32_0 = arith.constant 0 : i32
    %2 = arith.cmpi ne, %1, %c0_i32_0 : i32
    scf.if %2 {
      %cst_10 = arith.constant 0.000000e+00 : f32
      %12 = vector.broadcast %cst_10 : f32 to vector<256x128xf32>
      %c0_11 = arith.constant 0 : index
      %c0_12 = arith.constant 0 : index
      %13 = vector.load %arg7[%c0_11, %c0_12] : memref<256x128xf32, #tpu.memory_space<vmem>>, vector<256x128xf32>
      tpu.vector_store %arg7[%c0_11, %c0_12], %12 {strides = array<i32>} : memref<256x128xf32, #tpu.memory_space<vmem>>, vector<256x128xf32>,
    } else {
    }
    %c0 = arith.constant 0 : index
    %c0_1 = arith.constant 0 : index
    %3 = vector.load %arg7[%c0, %c0_1] : memref<256x128xf32, #tpu.memory_space<vmem>>, vector<256x128xf32>
    %c0_2 = arith.constant 0 : index
    %c0_3 = arith.constant 0 : index
    %4 = vector.load %arg3[%c0_2, %c0_3] : memref<256x128xbf16, #tpu.memory_space<vmem>>, vector<256x128xbf16>
    %c0_4 = arith.constant 0 : index
    %c0_5 = arith.constant 0 : index
    %5 = vector.load %arg4[%c0_4, %c0_5] : memref<128x128xbf16, #tpu.memory_space<vmem>>, vector<128x128xbf16>
    %cst = arith.constant dense<0.000000e+00> : vector<256x128xf32>
    %6 = tpu.matmul %4, %5, %cst {dimension_numbers = #tpu.dot_dimension_numbers<[1], [0], [0], [1], [0, 0, 1, 1], [], []>} : vector<256x128xbf16>, vector<128x128xbf16>, vector<256x128xf32> -> vector<256x128xf32>
    %7 = arith.addf %3, %6 : vector<256x128xf32>
    %c0_6 = arith.constant 0 : index
    %c0_7 = arith.constant 0 : index
    %8 = vector.load %arg7[%c0_6, %c0_7] : memref<256x128xf32, #tpu.memory_space<vmem>>, vector<256x128xf32>
    tpu.vector_store %arg7[%c0_6, %c0_7], %7 {strides = array<i32>} : memref<256x128xf32, #tpu.memory_space<vmem>>, vector<256x128xf32>,
    %c0_i32_8 = arith.constant 0 : i32
    %9 = arith.cmpi eq, %arg2, %c0_i32_8 : i32
    %10 = arith.extui %9 : i1 to i32
    %c0_i32_9 = arith.constant 0 : i32
    %11 = arith.cmpi ne, %10, %c0_i32_9 : i32
    scf.if %11 {
      %c0_10 = arith.constant 0 : index
      %c0_11 = arith.constant 0 : index
      %12 = vector.load %arg7[%c0_10, %c0_11] : memref<256x128xf32, #tpu.memory_space<vmem>>, vector<256x128xf32>
      %c0_12 = arith.constant 0 : index
      %c0_13 = arith.constant 0 : index
      %13 = vector.load %arg5[%c0_12, %c0_13] : memref<1x128xf32, #tpu.memory_space<vmem>>, vector<1x128xf32>
      %14 = vector.broadcast %13 : vector<1x128xf32> to vector<256x128xf32>
      %15 = arith.addf %12, %14 : vector<256x128xf32>
      %c0_14 = arith.constant 0 : index
      %c0_15 = arith.constant 0 : index
      %16 = vector.load %arg6[%c0_14, %c0_15] : memref<256x128xf32, #tpu.memory_space<vmem>>, vector<256x128xf32>
      tpu.vector_store %arg6[%c0_14, %c0_15], %15 {strides = array<i32>} : memref<256x128xf32, #tpu.memory_space<vmem>>, vector<256x128xf32>,
    } else {
    }
    return
  }
  func.func @transform_0(%arg0: i32, %arg1: i32, %arg2: i32) -> (i32, i32) {
    %c0_i32 = arith.constant 0 : i32
    return %arg0, %arg2 : i32, i32
  }
  func.func @transform_1(%arg0: i32, %arg1: i32, %arg2: i32) -> (i32, i32) {
    %c0_i32 = arith.constant 0 : i32
    return %arg2, %arg1 : i32, i32
  }
  func.func @transform_2(%arg0: i32, %arg1: i32, %arg2: i32) -> (i32, i32) {
    %c0_i32 = arith.constant 0 : i32
    %c0_i32_0 = arith.constant 0 : i32
    return %c0_i32, %arg1 : i32, i32
  }
  func.func @transform_3(%arg0: i32, %arg1: i32, %arg2: i32) -> (i32, i32) {
    %c0_i32 = arith.constant 0 : i32
    return %arg0, %arg1 : i32, i32
  }
}

</mosaic_0001>

<llo_original>
// kernel: conv2d.1
$region0: #{conv2d.1}
  #allocation0 [shape = 'u32[]', space=smem, size = 0x4, offset = 0x4, fixed_abs, tag = 'smem constant byte address 0x4 - core index']
  #allocation1 [shape = 'u32[72,128]{1,0:T(1,128)}', space=vmem, size = 0x9000, scoped, tag = 'internal scratch']
  #allocation2 [shape = 'f32[256,128]{1,0:T(8,128)}', space=vmem, size = 0x20000, scoped, tag = 'scratch operand']
  %s0 = inlined_call_operand.vmem [shape: bf16[256,128], index: 0, kind: input, shape index: {}]
  %s1 = inlined_call_operand.vmem [shape: bf16[128,384], index: 1, kind: input, shape index: {}]
  %s2 = inlined_call_operand.vmem [shape: f32[1,384], index: 2, kind: input, shape index: {}]
  %s3 = inlined_call_operand.hbm [shape: f32[256,384], index: 3, kind: output, shape index: {}]
  %s4 = sld [smem:[#allocation0]]
  $region94: #{conv2d.1} parent=0
    _
  %s6 = ssub.s32 1, %s4
  %s7 = scalar_select 0, %s6, %s4
  $region1: #{conv2d.1} parent=0
    #allocation3 [shape = 'u8[65536]{0}', space=vmem, size = 0x10000, scoped, tag = 'input window, operand 1']
    #allocation4 [shape = 'u8[262144]{0}', space=vmem, size = 0x40000, scoped, tag = 'output window, operand 0']
    #allocation5 [shape = 's32[2]{0}', space=sflag, size = 0x8, scoped, tag = 'scoped memory for conv2d.1']
    %8 = vsyncpa [#allocation5], 0
    %s9 = scalar_lea.sflag [#allocation5], 1
    %10 = vsyncpa %s9, 0
    loop: start=0, step=1, limit=5
    $region2: #{conv2d.1} parent=1 // loop_pre_header
      _
    $region3: #{conv2d.1} parent=1 // loop_header
      %s12 = sphi 0, %s16
      %p13 = scmp.ge.s32.totalorder %s12, 5
      %s19 = sphi 0, %s38
      %s20 = sphi 0, %s34
      %s21 = sphi 0, %s30
      %s22 = sphi 0, %s19
      %s23 = sphi 0, %s20
      %s24 = sphi 0, %s21
      %s25 = sphi 0, %s22
      %s26 = sphi 0, %s23
      %s27 = sphi 0, %s24
      %s43 = sphi 0, %s45
      %s46 = sphi 0, %s43
      %s47 = sphi 0, %s46
      %s63 = sphi 0, %s47
      %s71 = sphi 0, %s73
      %s74 = sphi 0, %s71
      %s75 = sphi 0, %s74
      %s91 = sphi 0, %s75
      %s97 = sphi 0, %s99
      %s100 = sphi 0, %s97
      %s101 = sphi 0, %s100
      %s117 = sphi 0, %s101
      %s125 = sphi 0, %s127
      %s128 = sphi 0, %s125
      %s129 = sphi 0, %s128
      %s145 = sphi 0, %s129
    $region4: #{conv2d.1} parent=1 // loop_header_branch
      %15 = sbr.rel (%p13) target = $region8
    $region5: #{conv2d.1} parent=1 // loop_body
      %s17 = ssub.s32 %s12, 1
      %s18 = ssub.s32 %s12, 2
      %s28 = sadd.s32 1, %s21
      %p29 = scmp.ge.s32.totalorder %s28, 1
      %s30 = scalar_select %p29, 0, %s28
      %s31 = sadd.s32 1, %s20
      %s32 = scalar_select %p29, %s31, %s20
      %p33 = scmp.ge.s32.totalorder %s32, 3
      %s34 = scalar_select %p33, 0, %s32
      %s35 = sadd.s32 1, %s19
      %s36 = scalar_select %p33, %s35, %s19
      %p37 = scmp.ge.s32.totalorder %s36, 1
      %s38 = scalar_select %p37, 0, %s36
      %s39 = ssub.s32 %s19, %s38
      %s40 = ssub.s32 %s21, %s30
      %s41 = sor.u32 %s39, %s40
      %p42 = scmp.eq.s32.totalorder %s41, 0
      %s44 = sadd.s32 %s43, 1
      %s45 = scalar_select %p42, %s43, %s44
      %p48 = pneg %p42
      %p49 = scmp.eq.s32.totalorder %s12, 2
      %p50 = por %p48, %p49
      %p51 = scmp.ne.s32.totalorder %s43, %s46
      %p52 = scmp.eq.s32.totalorder %s12, 0
      %p53 = por %p51, %p52
      %p54 = scmp.ne.s32.totalorder %s43, %s46
      %p55 = scmp.eq.s32.totalorder %s17, 2
      %p56 = por %p54, %p55
      %p57 = scmp.ne.s32.totalorder %s46, %s47
      %p58 = scmp.eq.s32.totalorder %s17, 0
      %p59 = por %p57, %p58
      %p60 = scmp.ne.s32.totalorder %s46, %s47
      %p61 = scmp.eq.s32.totalorder %s18, 2
      %p62 = por %p60, %p61
      %p64 = scmp.ne.s32.totalorder %s47, %s63
      %p65 = scmp.eq.s32.totalorder %s18, 0
      %p66 = por %p64, %p65
      %s67 = ssub.s32 %s21, %s30
      %s68 = ssub.s32 %s20, %s34
      %s69 = sor.u32 %s67, %s68
      %p70 = scmp.eq.s32.totalorder %s69, 0
      %s72 = sadd.s32 %s71, 1
      %s73 = scalar_select %p70, %s71, %s72
      %p76 = pneg %p70
      %p77 = scmp.eq.s32.totalorder %s12, 2
      %p78 = por %p76, %p77
      %p79 = scmp.ne.s32.totalorder %s71, %s74
      %p80 = scmp.eq.s32.totalorder %s12, 0
      %p81 = por %p79, %p80
      %p82 = scmp.ne.s32.totalorder %s71, %s74
      %p83 = scmp.eq.s32.totalorder %s17, 2
      %p84 = por %p82, %p83
      %p85 = scmp.ne.s32.totalorder %s74, %s75
      %p86 = scmp.eq.s32.totalorder %s17, 0
      %p87 = por %p85, %p86
      %p88 = scmp.ne.s32.totalorder %s74, %s75
      %p89 = scmp.eq.s32.totalorder %s18, 2
      %p90 = por %p88, %p89
      %p92 = scmp.ne.s32.totalorder %s75, %s91
      %p93 = scmp.eq.s32.totalorder %s18, 0
      %p94 = por %p92, %p93
      %s95 = ssub.s32 %s20, %s34
      %p96 = scmp.eq.s32.totalorder %s95, 0
      %s98 = sadd.s32 %s97, 1
      %s99 = scalar_select %p96, %s97, %s98
      %p102 = pneg %p96
      %p103 = scmp.eq.s32.totalorder %s12, 2
      %p104 = por %p102, %p103
      %p105 = scmp.ne.s32.totalorder %s97, %s100
      %p106 = scmp.eq.s32.totalorder %s12, 0
      %p107 = por %p105, %p106
      %p108 = scmp.ne.s32.totalorder %s97, %s100
      %p109 = scmp.eq.s32.totalorder %s17, 2
      %p110 = por %p108, %p109
      %p111 = scmp.ne.s32.totalorder %s100, %s101
      %p112 = scmp.eq.s32.totalorder %s17, 0
      %p113 = por %p111, %p112
      %p114 = scmp.ne.s32.totalorder %s100, %s101
      %p115 = scmp.eq.s32.totalorder %s18, 2
      %p116 = por %p114, %p115
      %p118 = scmp.ne.s32.totalorder %s101, %s117
      %p119 = scmp.eq.s32.totalorder %s18, 0
      %p120 = por %p118, %p119
      %s121 = ssub.s32 %s19, %s38
      %s122 = ssub.s32 %s20, %s34
      %s123 = sor.u32 %s121, %s122
      %p124 = scmp.eq.s32.totalorder %s123, 0
      %s126 = sadd.s32 %s125, 1
      %s127 = scalar_select %p124, %s125, %s126
      %p130 = pneg %p124
      %p131 = scmp.eq.s32.totalorder %s12, 2
      %p132 = por %p130, %p131
      %p133 = scmp.ne.s32.totalorder %s125, %s128
      %p134 = scmp.eq.s32.totalorder %s12, 0
      %p135 = por %p133, %p134
      %p136 = scmp.ne.s32.totalorder %s125, %s128
      %p137 = scmp.eq.s32.totalorder %s17, 2
      %p138 = por %p136, %p137
      %p139 = scmp.ne.s32.totalorder %s128, %s129
      %p140 = scmp.eq.s32.totalorder %s17, 0
      %p141 = por %p139, %p140
      %p142 = scmp.ne.s32.totalorder %s128, %s129
      %p143 = scmp.eq.s32.totalorder %s18, 2
      %p144 = por %p142, %p143
      %p146 = scmp.ne.s32.totalorder %s129, %s145
      %p147 = scmp.eq.s32.totalorder %s18, 0
      %p148 = por %p146, %p147
      %p149 = scmp.le.s32.totalorder 1, %s12
      %p150 = scmp.lt.s32.totalorder %s12, 4
      %p151 = pnand %p149, %p150
      %p152 = pneg %p151
      // Predicated region
      $region9: #{conv2d.1} parent=5 // pred_check
        _
      $region10: #{conv2d.1} parent=5 // pred_check_branch
        %154 = sbr.rel (%p151) target = $region12
      $region11: #{conv2d.1} parent=5 // pred_region
        %s155 = ssub.s32 %s12, 1
        // Predicated region
        $region13: #{conv2d.1} parent=11 // pred_check
          %p156 = pneg %p59
        $region14: #{conv2d.1} parent=11 // pred_check_branch
          %158 = sbr.rel (%p156) target = $region16
        $region15: #{conv2d.1} parent=11 // pred_region
          %s159 = smul.u32 32, %s22
          %p160 = scmp.lt.s32.totalorder %s159, 31
          %s161 = scalar_select %p160, %s159, 31
          %p162 = scmp.lt.s32.totalorder %s24, 0
          %s163 = scalar_select %p162, %s24, 0
          %s164 = sadd.s32 %s163, %s161
          %s165 = smul.addr %s164, 4
          %s166 = scalar_lea.vmem %s0, %s165
          %s167 = smul.u32 32, %s22
        $region16: #{conv2d.1} parent=11 // pred_fallthru
          _
      $region12: #{conv2d.1} parent=5 // pred_fallthru
        _
      %p168 = scmp.lt.s32.totalorder %s12, 3
      // Predicated region
      $region17: #{conv2d.1} parent=5 // pred_check
        %p169 = pneg %p168
      $region18: #{conv2d.1} parent=5 // pred_check_branch
        %171 = sbr.rel (%p169) target = $region20
      $region19: #{conv2d.1} parent=5 // pred_region
        // Predicated region
        $region21: #{conv2d.1} parent=19 // pred_check
          %p172 = pneg %p81
        $region22: #{conv2d.1} parent=19 // pred_check_branch
          %174 = sbr.rel (%p172) target = $region24
        $region23: #{conv2d.1} parent=19 // pred_region
          %s175 = sand.u32 %s71, 1
          %s176 = sand.u32 %s71, 1
          %s177 = smul.addr %s176, 64
          %s178 = scalar_lea.vmem [#allocation3], %s177
          %s179 = smul.u32 16, %s21
          %s180 = smul.addr %s179, 3
          %s181 = sadd.s32 %s20, %s180
          %s182 = smul.addr %s181, 4
          %s183 = scalar_lea.vmem %s1, %s182
          // Predicated region
          $region25: #{conv2d.1} parent=23 // pred_check
            _
          $region26: #{conv2d.1} parent=23 // pred_check_branch
            %185 = sbr.rel (0) target = $region28
          $region27: #{conv2d.1} parent=23 // pred_region
            // Predicated region
            $region29: #{conv2d.1} parent=27 // pred_check
              _
            $region30: #{conv2d.1} parent=27 // pred_check_branch
              %187 = sbr.rel target = $region32
            $region31: #{conv2d.1} parent=27 // pred_region
              // Predicated region
              $region44: #{conv2d.1} parent=31 // pred_check
                _
              $region45: #{conv2d.1} parent=31 // pred_check_branch
                %233 = sbr.rel (0) target = $region47
              $region46: #{conv2d.1} parent=31 // pred_region
                loop: start=0, step=1, limit=1
                $region48: #{conv2d.1} parent=46 // loop_pre_header
                  _
                $region49: #{conv2d.1} parent=46 // loop_header
                  %s235 = sphi 0, %s239
                  %p236 = scmp.ge.s32.totalorder %s235, 1
                  %s240 = sphi %s183, %s183
                  %s241 = sphi %s178, %s178
                $region50: #{conv2d.1} parent=46 // loop_header_branch
                  %238 = sbr.rel (%p236) target = $region54
                $region51: #{conv2d.1} parent=46 // loop_body
                  _
                $region52: #{conv2d.1} parent=46 // loop_footer
                  %s239 = sadd.s32 1, %s235
                $region53: #{conv2d.1} parent=46 // loop_footer_branch
                  %234 = sbr.rel target = $region49
                $region54: #{conv2d.1} parent=46 // loop_exit
                  _
                %s243 = ssub.s32 16, 1
                loop: start=0, step=1, limit=1
                $region55: #{conv2d.1} parent=46 // loop_pre_header
                  _
                $region56: #{conv2d.1} parent=46 // loop_header
                  %s245 = sphi 0, %s249
                  %p246 = scmp.ge.s32.totalorder %s245, 1
                  %s250 = sphi %s183, %s183
                  %s251 = sphi %s178, %s178
                $region57: #{conv2d.1} parent=46 // loop_header_branch
                  %248 = sbr.rel (%p246) target = $region61
                $region58: #{conv2d.1} parent=46 // loop_body
                  %v252 = vld [vmem:[%s250] sm:%s243]
                  %253 = vst [vmem:[%s251] sm:%s243] %v252
                  %v254 = vld [vmem:[%s250 + $0xc] sm:%s243]
                  %255 = vst [vmem:[%s251 + $0x4] sm:%s243] %v254
                  %v256 = vld [vmem:[%s250 + $0x18] sm:%s243]
                  %257 = vst [vmem:[%s251 + $0x8] sm:%s243] %v256
                  %v258 = vld [vmem:[%s250 + $0x24] sm:%s243]
                  %259 = vst [vmem:[%s251 + $0xc] sm:%s243] %v258
                  %v260 = vld [vmem:[%s250 + $0x30] sm:%s243]
                  %261 = vst [vmem:[%s251 + $0x10] sm:%s243] %v260
                  %v262 = vld [vmem:[%s250 + $0x3c] sm:%s243]
                  %263 = vst [vmem:[%s251 + $0x14] sm:%s243] %v262
                  %v264 = vld [vmem:[%s250 + $0x48] sm:%s243]
                  %265 = vst [vmem:[%s251 + $0x18] sm:%s243] %v264
                  %v266 = vld [vmem:[%s250 + $0x54] sm:%s243]
                  %267 = vst [vmem:[%s251 + $0x1c] sm:%s243] %v266
                  %v268 = vld [vmem:[%s250 + $0x60] sm:%s243]
                  %269 = vst [vmem:[%s251 + $0x20] sm:%s243] %v268
                  %v270 = vld [vmem:[%s250 + $0x6c] sm:%s243]
                  %271 = vst [vmem:[%s251 + $0x24] sm:%s243] %v270
                  %v272 = vld [vmem:[%s250 + $0x78] sm:%s243]
                  %273 = vst [vmem:[%s251 + $0x28] sm:%s243] %v272
                  %v274 = vld [vmem:[%s250 + $0x84] sm:%s243]
                  %275 = vst [vmem:[%s251 + $0x2c] sm:%s243] %v274
                  %v276 = vld [vmem:[%s250 + $0x90] sm:%s243]
                  %277 = vst [vmem:[%s251 + $0x30] sm:%s243] %v276
                  %v278 = vld [vmem:[%s250 + $0x9c] sm:%s243]
                  %279 = vst [vmem:[%s251 + $0x34] sm:%s243] %v278
                  %v280 = vld [vmem:[%s250 + $0xa8] sm:%s243]
                  %281 = vst [vmem:[%s251 + $0x38] sm:%s243] %v280
                  %v282 = vld [vmem:[%s250 + $0xb4] sm:%s243]
                  %283 = vst [vmem:[%s251 + $0x3c] sm:%s243] %v282
                $region59: #{conv2d.1} parent=46 // loop_footer
                  %s249 = sadd.s32 1, %s245
                $region60: #{conv2d.1} parent=46 // loop_footer_branch
                  %244 = sbr.rel target = $region56
                $region61: #{conv2d.1} parent=46 // loop_exit
                  _
              $region47: #{conv2d.1} parent=31 // pred_fallthru
                _
            $region32: #{conv2d.1} parent=27 // pred_fallthru
              _
            // Predicated region
            $region33: #{conv2d.1} parent=27 // pred_check
              _
            $region34: #{conv2d.1} parent=27 // pred_check_branch
              %189 = sbr.rel (0) target = $region36
            $region35: #{conv2d.1} parent=27 // pred_region
              %s191 = ssub.s32 16, 1
              loop: start=0, step=1, limit=1
              $region37: #{conv2d.1} parent=35 // loop_pre_header
                _
              $region38: #{conv2d.1} parent=35 // loop_header
                %s193 = sphi 0, %s197
                %p194 = scmp.ge.s32.totalorder %s193, 1
                %s198 = sphi %s183, %s183
                %s199 = sphi %s178, %s178
              $region39: #{conv2d.1} parent=35 // loop_header_branch
                %196 = sbr.rel (%p194) target = $region43
              $region40: #{conv2d.1} parent=35 // loop_body
                %v200 = vld [vmem:[%s198] sm:%s191]
                %201 = vst [vmem:[%s199] sm:%s191] %v200
                %v202 = vld [vmem:[%s198 + $0xc] sm:%s191]
                %203 = vst [vmem:[%s199 + $0x4] sm:%s191] %v202
                %v204 = vld [vmem:[%s198 + $0x18] sm:%s191]
                %205 = vst [vmem:[%s199 + $0x8] sm:%s191] %v204
                %v206 = vld [vmem:[%s198 + $0x24] sm:%s191]
                %207 = vst [vmem:[%s199 + $0xc] sm:%s191] %v206
                %v208 = vld [vmem:[%s198 + $0x30] sm:%s191]
                %209 = vst [vmem:[%s199 + $0x10] sm:%s191] %v208
                %v210 = vld [vmem:[%s198 + $0x3c] sm:%s191]
                %211 = vst [vmem:[%s199 + $0x14] sm:%s191] %v210
                %v212 = vld [vmem:[%s198 + $0x48] sm:%s191]
                %213 = vst [vmem:[%s199 + $0x18] sm:%s191] %v212
                %v214 = vld [vmem:[%s198 + $0x54] sm:%s191]
                %215 = vst [vmem:[%s199 + $0x1c] sm:%s191] %v214
                %v216 = vld [vmem:[%s198 + $0x60] sm:%s191]
                %217 = vst [vmem:[%s199 + $0x20] sm:%s191] %v216
                %v218 = vld [vmem:[%s198 + $0x6c] sm:%s191]
                %219 = vst [vmem:[%s199 + $0x24] sm:%s191] %v218
                %v220 = vld [vmem:[%s198 + $0x78] sm:%s191]
                %221 = vst [vmem:[%s199 + $0x28] sm:%s191] %v220
                %v222 = vld [vmem:[%s198 + $0x84] sm:%s191]
                %223 = vst [vmem:[%s199 + $0x2c] sm:%s191] %v222
                %v224 = vld [vmem:[%s198 + $0x90] sm:%s191]
                %225 = vst [vmem:[%s199 + $0x30] sm:%s191] %v224
                %v226 = vld [vmem:[%s198 + $0x9c] sm:%s191]
                %227 = vst [vmem:[%s199 + $0x34] sm:%s191] %v226
                %v228 = vld [vmem:[%s198 + $0xa8] sm:%s191]
                %229 = vst [vmem:[%s199 + $0x38] sm:%s191] %v228
                %v230 = vld [vmem:[%s198 + $0xb4] sm:%s191]
                %231 = vst [vmem:[%s199 + $0x3c] sm:%s191] %v230
              $region41: #{conv2d.1} parent=35 // loop_footer
                %s197 = sadd.s32 1, %s193
              $region42: #{conv2d.1} parent=35 // loop_footer_branch
                %192 = sbr.rel target = $region38
              $region43: #{conv2d.1} parent=35 // loop_exit
                _
            $region36: #{conv2d.1} parent=27 // pred_fallthru
              _
          $region28: #{conv2d.1} parent=23 // pred_fallthru
            _
          %284 = vnop
        $region24: #{conv2d.1} parent=19 // pred_fallthru
          _
        // Predicated region
        $region62: #{conv2d.1} parent=19 // pred_check
          %p285 = pneg %p107
        $region63: #{conv2d.1} parent=19 // pred_check_branch
          %287 = sbr.rel (%p285) target = $region65
        $region64: #{conv2d.1} parent=19 // pred_region
          %p288 = scmp.lt.s32.totalorder %s20, 2
          %s289 = scalar_select %p288, %s20, 2
          %s290 = scalar_lea.vmem %s2, %s289
        $region65: #{conv2d.1} parent=19 // pred_fallthru
          _
      $region20: #{conv2d.1} parent=5 // pred_fallthru
        _
      %p291 = scmp.le.s32.totalorder 1, %s12
      %p292 = scmp.lt.s32.totalorder %s12, 4
      %p293 = pnand %p291, %p292
      %p294 = pneg %p293
      // Predicated region
      $region66: #{conv2d.1} parent=5 // pred_check
        _
      $region67: #{conv2d.1} parent=5 // pred_check_branch
        %296 = sbr.rel (%p293) target = $region69
      $region68: #{conv2d.1} parent=5 // pred_region
        %s297 = ssub.s32 %s12, 1
        %s298 = sand.u32 %s74, 1
        %s299 = sand.u32 %s74, 1
        %s300 = smul.addr %s299, 64
        %s301 = scalar_lea.vmem [#allocation3], %s300
        // Predicated region
        $region70: #{conv2d.1} parent=68 // pred_check
          %p302 = pneg %p87
        $region71: #{conv2d.1} parent=68 // pred_check_branch
          %304 = sbr.rel (%p302) target = $region73
        $region72: #{conv2d.1} parent=68 // pred_region
          _
        $region73: #{conv2d.1} parent=68 // pred_fallthru
          _
        %s305 = smul.u32 32, %s22
        %p306 = scmp.lt.s32.totalorder %s305, 31
        %s307 = scalar_select %p306, %s305, 31
        %p308 = scmp.lt.s32.totalorder %s24, 0
        %s309 = scalar_select %p308, %s24, 0
        %s310 = sadd.s32 %s309, %s307
        %s311 = smul.addr %s310, 4
        %s312 = scalar_lea.vmem %s0, %s311
        %p313 = pneg %p59
        %p314 = pneg %p56
        %s315 = sand.u32 %s74, 1
        %s316 = sand.u32 %s74, 1
        %s317 = smul.addr %s316, 64
        %s318 = scalar_lea.vmem [#allocation3], %s317
        %p319 = pneg %p87
        %p320 = pneg %p84
        %p321 = scmp.lt.s32.totalorder %s23, 2
        %s322 = scalar_select %p321, %s23, 2
        %s323 = scalar_lea.vmem %s2, %s322
        %p324 = pneg %p113
        %p325 = pneg %p110
        %p326 = pneg %p141
        %p327 = pneg %p138
        %s328 = sand.u32 %s128, 1
        %s329 = scalar_lea.sflag [#allocation5], %s328
        %s330 = sand.u32 %s128, 1
        %s331 = smul.addr %s330, 256
        %s332 = scalar_lea.vmem [#allocation4], %s331
        %s333 = smul.u32 32, %s22
        %p334 = scmp.lt.s32.totalorder %s333, 31
        %s335 = scalar_select %p334, %s333, 31
        %p336 = scmp.lt.s32.totalorder %s24, 0
        %s337 = scalar_select %p336, %s24, 0
        %s338 = sadd.s32 %s337, %s335
        %s339 = smul.addr %s338, 4
        %s340 = scalar_lea.vmem %s0, %s339
        %s341 = smul.u32 32, %s22
        %s342 = smul.u32 16, %s24
        %p343 = scmp.lt.s32.totalorder %s23, 2
        %s344 = scalar_select %p343, %s23, 2
        %s345 = scalar_lea.vmem %s2, %s344
        %s346 = smul.u32 32, %s22
        %p347 = scmp.eq.s32.totalorder %s24, 0
        // Predicated region
        $region74: #{conv2d.1} parent=68 // pred_check
          %p348 = pneg %p347
        $region75: #{conv2d.1} parent=68 // pred_check_branch
          %350 = sbr.rel (%p348) target = $region77
        $region76: #{conv2d.1} parent=68 // pred_region
          %351 = vst [vmem:[#allocation2] sm:$0xff] 0.0
          %352 = vst [vmem:[#allocation2 + $0x8] sm:$0xff] 0.0
          %353 = vst [vmem:[#allocation2 + $0x10] sm:$0xff] 0.0
          %354 = vst [vmem:[#allocation2 + $0x18] sm:$0xff] 0.0
          %355 = vst [vmem:[#allocation2 + $0x20] sm:$0xff] 0.0
          %356 = vst [vmem:[#allocation2 + $0x28] sm:$0xff] 0.0
          %357 = vst [vmem:[#allocation2 + $0x30] sm:$0xff] 0.0
          %358 = vst [vmem:[#allocation2 + $0x38] sm:$0xff] 0.0
          %359 = vst [vmem:[#allocation2 + $0x40] sm:$0xff] 0.0
          %360 = vst [vmem:[#allocation2 + $0x48] sm:$0xff] 0.0
          %361 = vst [vmem:[#allocation2 + $0x50] sm:$0xff] 0.0
          %362 = vst [vmem:[#allocation2 + $0x58] sm:$0xff] 0.0
          %363 = vst [vmem:[#allocation2 + $0x60] sm:$0xff] 0.0
          %364 = vst [vmem:[#allocation2 + $0x68] sm:$0xff] 0.0
          %365 = vst [vmem:[#allocation2 + $0x70] sm:$0xff] 0.0
          %366 = vst [vmem:[#allocation2 + $0x78] sm:$0xff] 0.0
          %367 = vst [vmem:[#allocation2 + $0x80] sm:$0xff] 0.0
          %368 = vst [vmem:[#allocation2 + $0x88] sm:$0xff] 0.0
          %369 = vst [vmem:[#allocation2 + $0x90] sm:$0xff] 0.0
          %370 = vst [vmem:[#allocation2 + $0x98] sm:$0xff] 0.0
          %371 = vst [vmem:[#allocation2 + $0xa0] sm:$0xff] 0.0
          %372 = vst [vmem:[#allocation2 + $0xa8] sm:$0xff] 0.0
          %373 = vst [vmem:[#allocation2 + $0xb0] sm:$0xff] 0.0
          %374 = vst [vmem:[#allocation2 + $0xb8] sm:$0xff] 0.0
          %375 = vst [vmem:[#allocation2 + $0xc0] sm:$0xff] 0.0
          %376 = vst [vmem:[#allocation2 + $0xc8] sm:$0xff] 0.0
          %377 = vst [vmem:[#allocation2 + $0xd0] sm:$0xff] 0.0
          %378 = vst [vmem:[#allocation2 + $0xd8] sm:$0xff] 0.0
          %379 = vst [vmem:[#allocation2 + $0xe0] sm:$0xff] 0.0
          %380 = vst [vmem:[#allocation2 + $0xe8] sm:$0xff] 0.0
          %381 = vst [vmem:[#allocation2 + $0xf0] sm:$0xff] 0.0
          %382 = vst [vmem:[#allocation2 + $0xf8] sm:$0xff] 0.0
        $region77: #{conv2d.1} parent=68 // pred_fallthru
          _
        %v383 = vld [vmem:[#allocation2] sm:$0xff]
        %v384 = vld [vmem:[#allocation2 + $0x8] sm:$0xff]
        %v385 = vld [vmem:[#allocation2 + $0x10] sm:$0xff]
        %v386 = vld [vmem:[#allocation2 + $0x18] sm:$0xff]
        %v387 = vld [vmem:[#allocation2 + $0x20] sm:$0xff]
        %v388 = vld [vmem:[#allocation2 + $0x28] sm:$0xff]
        %v389 = vld [vmem:[#allocation2 + $0x30] sm:$0xff]
        %v390 = vld [vmem:[#allocation2 + $0x38] sm:$0xff]
        %v391 = vld [vmem:[#allocation2 + $0x40] sm:$0xff]
        %v392 = vld [vmem:[#allocation2 + $0x48] sm:$0xff]
        %v393 = vld [vmem:[#allocation2 + $0x50] sm:$0xff]
        %v394 = vld [vmem:[#allocation2 + $0x58] sm:$0xff]
        %v395 = vld [vmem:[#allocation2 + $0x60] sm:$0xff]
        %v396 = vld [vmem:[#allocation2 + $0x68] sm:$0xff]
        %v397 = vld [vmem:[#allocation2 + $0x70] sm:$0xff]
        %v398 = vld [vmem:[#allocation2 + $0x78] sm:$0xff]
        %v399 = vld [vmem:[#allocation2 + $0x80] sm:$0xff]
        %v400 = vld [vmem:[#allocation2 + $0x88] sm:$0xff]
        %v401 = vld [vmem:[#allocation2 + $0x90] sm:$0xff]
        %v402 = vld [vmem:[#allocation2 + $0x98] sm:$0xff]
        %v403 = vld [vmem:[#allocation2 + $0xa0] sm:$0xff]
        %v404 = vld [vmem:[#allocation2 + $0xa8] sm:$0xff]
        %v405 = vld [vmem:[#allocation2 + $0xb0] sm:$0xff]
        %v406 = vld [vmem:[#allocation2 + $0xb8] sm:$0xff]
        %v407 = vld [vmem:[#allocation2 + $0xc0] sm:$0xff]
        %v408 = vld [vmem:[#allocation2 + $0xc8] sm:$0xff]
        %v409 = vld [vmem:[#allocation2 + $0xd0] sm:$0xff]
        %v410 = vld [vmem:[#allocation2 + $0xd8] sm:$0xff]
        %v411 = vld [vmem:[#allocation2 + $0xe0] sm:$0xff]
        %v412 = vld [vmem:[#allocation2 + $0xe8] sm:$0xff]
        %v413 = vld [vmem:[#allocation2 + $0xf0] sm:$0xff]
        %v414 = vld [vmem:[#allocation2 + $0xf8] sm:$0xff]
        %v415 = vld [vmem:[%s340] sm:$0xf]
        %v416 = vld [vmem:[%s340 + $0x4] sm:$0xf]
        %v417 = vld [vmem:[%s340 + $0x8] sm:$0xf]
        %v418 = vld [vmem:[%s340 + $0xc] sm:$0xf]
        %v419 = vld [vmem:[%s340 + $0x10] sm:$0xf]
        %v420 = vld [vmem:[%s340 + $0x14] sm:$0xf]
        %v421 = vld [vmem:[%s340 + $0x18] sm:$0xf]
        %v422 = vld [vmem:[%s340 + $0x1c] sm:$0xf]
        %v423 = vld [vmem:[%s340 + $0x20] sm:$0xf]
        %v424 = vld [vmem:[%s340 + $0x24] sm:$0xf]
        %v425 = vld [vmem:[%s340 + $0x28] sm:$0xf]
        %v426 = vld [vmem:[%s340 + $0x2c] sm:$0xf]
        %v427 = vld [vmem:[%s340 + $0x30] sm:$0xf]
        %v428 = vld [vmem:[%s340 + $0x34] sm:$0xf]
        %v429 = vld [vmem:[%s340 + $0x38] sm:$0xf]
        %v430 = vld [vmem:[%s340 + $0x3c] sm:$0xf]
        %v431 = vld [vmem:[%s340 + $0x40] sm:$0xf]
        %v432 = vld [vmem:[%s340 + $0x44] sm:$0xf]
        %v433 = vld [vmem:[%s340 + $0x48] sm:$0xf]
        %v434 = vld [vmem:[%s340 + $0x4c] sm:$0xf]
        %v435 = vld [vmem:[%s340 + $0x50] sm:$0xf]
        %v436 = vld [vmem:[%s340 + $0x54] sm:$0xf]
        %v437 = vld [vmem:[%s340 + $0x58] sm:$0xf]
        %v438 = vld [vmem:[%s340 + $0x5c] sm:$0xf]
        %v439 = vld [vmem:[%s340 + $0x60] sm:$0xf]
        %v440 = vld [vmem:[%s340 + $0x64] sm:$0xf]
        %v441 = vld [vmem:[%s340 + $0x68] sm:$0xf]
        %v442 = vld [vmem:[%s340 + $0x6c] sm:$0xf]
        %v443 = vld [vmem:[%s340 + $0x70] sm:$0xf]
        %v444 = vld [vmem:[%s340 + $0x74] sm:$0xf]
        %v445 = vld [vmem:[%s340 + $0x78] sm:$0xf]
        %v446 = vld [vmem:[%s340 + $0x7c] sm:$0xf]
        %v447 = vld [vmem:[%s301] sm:$0xf]
        %v448 = vld [vmem:[%s301 + $0x4] sm:$0xf]
        %v449 = vld [vmem:[%s301 + $0x8] sm:$0xf]
        %v450 = vld [vmem:[%s301 + $0xc] sm:$0xf]
        %v451 = vld [vmem:[%s301 + $0x10] sm:$0xf]
        %v452 = vld [vmem:[%s301 + $0x14] sm:$0xf]
        %v453 = vld [vmem:[%s301 + $0x18] sm:$0xf]
        %v454 = vld [vmem:[%s301 + $0x1c] sm:$0xf]
        %v455 = vld [vmem:[%s301 + $0x20] sm:$0xf]
        %v456 = vld [vmem:[%s301 + $0x24] sm:$0xf]
        %v457 = vld [vmem:[%s301 + $0x28] sm:$0xf]
        %v458 = vld [vmem:[%s301 + $0x2c] sm:$0xf]
        %v459 = vld [vmem:[%s301 + $0x30] sm:$0xf]
        %v460 = vld [vmem:[%s301 + $0x34] sm:$0xf]
        %v461 = vld [vmem:[%s301 + $0x38] sm:$0xf]
        %v462 = vld [vmem:[%s301 + $0x3c] sm:$0xf]
        %v495 = vunpack.c.l.b16 %v415
        %v496 = vunpack.c.l.b16 %v416
        %v497 = vunpack.c.l.b16 %v417
        %v498 = vunpack.c.l.b16 %v418
        %v499 = vunpack.c.l.b16 %v419
        %v500 = vunpack.c.l.b16 %v420
        %v501 = vunpack.c.l.b16 %v421
        %v502 = vunpack.c.l.b16 %v422
        %v503 = vunpack.c.l.b16 %v423
        %v504 = vunpack.c.l.b16 %v424
        %v505 = vunpack.c.l.b16 %v425
        %v506 = vunpack.c.l.b16 %v426
        %v507 = vunpack.c.l.b16 %v427
        %v508 = vunpack.c.l.b16 %v428
        %v509 = vunpack.c.l.b16 %v429
        %v510 = vunpack.c.l.b16 %v430
        %v511 = vunpack.c.l.b16 %v431
        %v512 = vunpack.c.l.b16 %v432
        %v513 = vunpack.c.l.b16 %v433
        %v514 = vunpack.c.l.b16 %v434
        %v515 = vunpack.c.l.b16 %v435
        %v516 = vunpack.c.l.b16 %v436
        %v517 = vunpack.c.l.b16 %v437
        %v518 = vunpack.c.l.b16 %v438
        %v519 = vunpack.c.l.b16 %v439
        %v520 = vunpack.c.l.b16 %v440
        %v521 = vunpack.c.l.b16 %v441
        %v522 = vunpack.c.l.b16 %v442
        %v523 = vunpack.c.l.b16 %v443
        %v524 = vunpack.c.l.b16 %v444
        %v525 = vunpack.c.l.b16 %v445
        %v526 = vunpack.c.l.b16 %v446
        %v527 = vpack.c.b16 %v496, %v495
        %v528 = vpack.c.b16 %v498, %v497
        %v529 = vpack.c.b16 %v500, %v499
        %v530 = vpack.c.b16 %v502, %v501
        %v531 = vpack.c.b16 %v504, %v503
        %v532 = vpack.c.b16 %v506, %v505
        %v533 = vpack.c.b16 %v508, %v507
        %v534 = vpack.c.b16 %v510, %v509
        %v535 = vpack.c.b16 %v512, %v511
        %v536 = vpack.c.b16 %v514, %v513
        %v537 = vpack.c.b16 %v516, %v515
        %v538 = vpack.c.b16 %v518, %v517
        %v539 = vpack.c.b16 %v520, %v519
        %v540 = vpack.c.b16 %v522, %v521
        %v541 = vpack.c.b16 %v524, %v523
        %v542 = vpack.c.b16 %v526, %v525
        %v575 = vunpack.c.l.b16 %v447
        %v576 = vunpack.c.l.b16 %v448
        %v577 = vunpack.c.l.b16 %v449
        %v578 = vunpack.c.l.b16 %v450
        %v579 = vunpack.c.l.b16 %v451
        %v580 = vunpack.c.l.b16 %v452
        %v581 = vunpack.c.l.b16 %v453
        %v582 = vunpack.c.l.b16 %v454
        %v583 = vunpack.c.l.b16 %v455
        %v584 = vunpack.c.l.b16 %v456
        %v585 = vunpack.c.l.b16 %v457
        %v586 = vunpack.c.l.b16 %v458
        %v587 = vunpack.c.l.b16 %v459
        %v588 = vunpack.c.l.b16 %v460
        %v589 = vunpack.c.l.b16 %v461
        %v590 = vunpack.c.l.b16 %v462
        %v591 = vpack.c.b16 %v576, %v575
        %v592 = vpack.c.b16 %v578, %v577
        %v593 = vpack.c.b16 %v580, %v579
        %v594 = vpack.c.b16 %v582, %v581
        %v595 = vpack.c.b16 %v584, %v583
        %v596 = vpack.c.b16 %v586, %v585
        %v597 = vpack.c.b16 %v588, %v587
        %v598 = vpack.c.b16 %v590, %v589
        %607 = vmatpush.bf16.msra.mxu0 %v598
        %608 = vmatpush.bf16.msra.mxu0 %v597
        %609 = vmatpush.bf16.msra.mxu0 %v596
        %610 = vmatpush.bf16.msra.mxu0 %v595
        %611 = vmatpush.bf16.msra.mxu0 %v594
        %612 = vmatpush.bf16.msra.mxu0 %v593
        %613 = vmatpush.bf16.msra.mxu0 %v592
        %614 = vmatpush.bf16.msra.mxu0 %v591
        %615 = vmatmul.bf16.gmra.mxu0 %v527
        %v616 = vpop.f32.mrf.mxu0
        %v617 = vadd.f32 0.0, %v616
        %v618 = vpop.f32.mrf.mxu0
        %v619 = vadd.f32 0.0, %v618
        %620 = vmatmul.bf16.gmra.mxu0 %v528
        %v621 = vpop.f32.mrf.mxu0
        %v622 = vadd.f32 0.0, %v621
        %v623 = vpop.f32.mrf.mxu0
        %v624 = vadd.f32 0.0, %v623
        %625 = vmatmul.bf16.gmra.mxu0 %v529
        %v626 = vpop.f32.mrf.mxu0
        %v627 = vadd.f32 0.0, %v626
        %v628 = vpop.f32.mrf.mxu0
        %v629 = vadd.f32 0.0, %v628
        %630 = vmatmul.bf16.gmra.mxu0 %v530
        %v631 = vpop.f32.mrf.mxu0
        %v632 = vadd.f32 0.0, %v631
        %v633 = vpop.f32.mrf.mxu0
        %v634 = vadd.f32 0.0, %v633
        %635 = vmatmul.bf16.gmra.mxu0 %v531
        %v636 = vpop.f32.mrf.mxu0
        %v637 = vadd.f32 0.0, %v636
        %v638 = vpop.f32.mrf.mxu0
        %v639 = vadd.f32 0.0, %v638
        %640 = vmatmul.bf16.gmra.mxu0 %v532
        %v641 = vpop.f32.mrf.mxu0
        %v642 = vadd.f32 0.0, %v641
        %v643 = vpop.f32.mrf.mxu0
        %v644 = vadd.f32 0.0, %v643
        %645 = vmatmul.bf16.gmra.mxu0 %v533
        %v646 = vpop.f32.mrf.mxu0
        %v647 = vadd.f32 0.0, %v646
        %v648 = vpop.f32.mrf.mxu0
        %v649 = vadd.f32 0.0, %v648
        %650 = vmatmul.bf16.gmra.mxu0 %v534
        %v651 = vpop.f32.mrf.mxu0
        %v652 = vadd.f32 0.0, %v651
        %v653 = vpop.f32.mrf.mxu0
        %v654 = vadd.f32 0.0, %v653
        %655 = vmatmul.bf16.gmra.mxu0 %v535
        %v656 = vpop.f32.mrf.mxu0
        %v657 = vadd.f32 0.0, %v656
        %v658 = vpop.f32.mrf.mxu0
        %v659 = vadd.f32 0.0, %v658
        %660 = vmatmul.bf16.gmra.mxu0 %v536
        %v661 = vpop.f32.mrf.mxu0
        %v662 = vadd.f32 0.0, %v661
        %v663 = vpop.f32.mrf.mxu0
        %v664 = vadd.f32 0.0, %v663
        %665 = vmatmul.bf16.gmra.mxu0 %v537
        %v666 = vpop.f32.mrf.mxu0
        %v667 = vadd.f32 0.0, %v666
        %v668 = vpop.f32.mrf.mxu0
        %v669 = vadd.f32 0.0, %v668
        %670 = vmatmul.bf16.gmra.mxu0 %v538
        %v671 = vpop.f32.mrf.mxu0
        %v672 = vadd.f32 0.0, %v671
        %v673 = vpop.f32.mrf.mxu0
        %v674 = vadd.f32 0.0, %v673
        %675 = vmatmul.bf16.gmra.mxu0 %v539
        %v676 = vpop.f32.mrf.mxu0
        %v677 = vadd.f32 0.0, %v676
        %v678 = vpop.f32.mrf.mxu0
        %v679 = vadd.f32 0.0, %v678
        %680 = vmatmul.bf16.gmra.mxu0 %v540
        %v681 = vpop.f32.mrf.mxu0
        %v682 = vadd.f32 0.0, %v681
        %v683 = vpop.f32.mrf.mxu0
        %v684 = vadd.f32 0.0, %v683
        %685 = vmatmul.bf16.gmra.mxu0 %v541
        %v686 = vpop.f32.mrf.mxu0
        %v687 = vadd.f32 0.0, %v686
        %v688 = vpop.f32.mrf.mxu0
        %v689 = vadd.f32 0.0, %v688
        %690 = vmatmul.bf16.gmra.mxu0 %v542
        %v691 = vpop.f32.mrf.mxu0
        %v692 = vadd.f32 0.0, %v691
        %v693 = vpop.f32.mrf.mxu0
        %v694 = vadd.f32 0.0, %v693
        %695 = vdwg.mxu0
        %v696 = vadd.f32 %v383, %v617
        %v697 = vadd.f32 %v384, %v619
        %v698 = vadd.f32 %v385, %v622
        %v699 = vadd.f32 %v386, %v624
        %v700 = vadd.f32 %v387, %v627
        %v701 = vadd.f32 %v388, %v629
        %v702 = vadd.f32 %v389, %v632
        %v703 = vadd.f32 %v390, %v634
        %v704 = vadd.f32 %v391, %v637
        %v705 = vadd.f32 %v392, %v639
        %v706 = vadd.f32 %v393, %v642
        %v707 = vadd.f32 %v394, %v644
        %v708 = vadd.f32 %v395, %v647
        %v709 = vadd.f32 %v396, %v649
        %v710 = vadd.f32 %v397, %v652
        %v711 = vadd.f32 %v398, %v654
        %v712 = vadd.f32 %v399, %v657
        %v713 = vadd.f32 %v400, %v659
        %v714 = vadd.f32 %v401, %v662
        %v715 = vadd.f32 %v402, %v664
        %v716 = vadd.f32 %v403, %v667
        %v717 = vadd.f32 %v404, %v669
        %v718 = vadd.f32 %v405, %v672
        %v719 = vadd.f32 %v406, %v674
        %v720 = vadd.f32 %v407, %v677
        %v721 = vadd.f32 %v408, %v679
        %v722 = vadd.f32 %v409, %v682
        %v723 = vadd.f32 %v410, %v684
        %v724 = vadd.f32 %v411, %v687
        %v725 = vadd.f32 %v412, %v689
        %v726 = vadd.f32 %v413, %v692
        %v727 = vadd.f32 %v414, %v694
        %728 = vst [vmem:[#allocation2] sm:$0xff] %v696
        %729 = vst [vmem:[#allocation2 + $0x8] sm:$0xff] %v697
        %730 = vst [vmem:[#allocation2 + $0x10] sm:$0xff] %v698
        %731 = vst [vmem:[#allocation2 + $0x18] sm:$0xff] %v699
        %732 = vst [vmem:[#allocation2 + $0x20] sm:$0xff] %v700
        %733 = vst [vmem:[#allocation2 + $0x28] sm:$0xff] %v701
        %734 = vst [vmem:[#allocation2 + $0x30] sm:$0xff] %v702
        %735 = vst [vmem:[#allocation2 + $0x38] sm:$0xff] %v703
        %736 = vst [vmem:[#allocation2 + $0x40] sm:$0xff] %v704
        %737 = vst [vmem:[#allocation2 + $0x48] sm:$0xff] %v705
        %738 = vst [vmem:[#allocation2 + $0x50] sm:$0xff] %v706
        %739 = vst [vmem:[#allocation2 + $0x58] sm:$0xff] %v707
        %740 = vst [vmem:[#allocation2 + $0x60] sm:$0xff] %v708
        %741 = vst [vmem:[#allocation2 + $0x68] sm:$0xff] %v709
        %742 = vst [vmem:[#allocation2 + $0x70] sm:$0xff] %v710
        %743 = vst [vmem:[#allocation2 + $0x78] sm:$0xff] %v711
        %744 = vst [vmem:[#allocation2 + $0x80] sm:$0xff] %v712
        %745 = vst [vmem:[#allocation2 + $0x88] sm:$0xff] %v713
        %746 = vst [vmem:[#allocation2 + $0x90] sm:$0xff] %v714
        %747 = vst [vmem:[#allocation2 + $0x98] sm:$0xff] %v715
        %748 = vst [vmem:[#allocation2 + $0xa0] sm:$0xff] %v716
        %749 = vst [vmem:[#allocation2 + $0xa8] sm:$0xff] %v717
        %750 = vst [vmem:[#allocation2 + $0xb0] sm:$0xff] %v718
        %751 = vst [vmem:[#allocation2 + $0xb8] sm:$0xff] %v719
        %752 = vst [vmem:[#allocation2 + $0xc0] sm:$0xff] %v720
        %753 = vst [vmem:[#allocation2 + $0xc8] sm:$0xff] %v721
        %754 = vst [vmem:[#allocation2 + $0xd0] sm:$0xff] %v722
        %755 = vst [vmem:[#allocation2 + $0xd8] sm:$0xff] %v723
        %756 = vst [vmem:[#allocation2 + $0xe0] sm:$0xff] %v724
        %757 = vst [vmem:[#allocation2 + $0xe8] sm:$0xff] %v725
        %758 = vst [vmem:[#allocation2 + $0xf0] sm:$0xff] %v726
        %759 = vst [vmem:[#allocation2 + $0xf8] sm:$0xff] %v727
        // Predicated region
        $region78: #{conv2d.1} parent=68 // pred_check
          %p760 = pneg %p347
        $region79: #{conv2d.1} parent=68 // pred_check_branch
          %762 = sbr.rel (%p760) target = $region81
        $region80: #{conv2d.1} parent=68 // pred_region
          %v763 = vld [vmem:[#allocation2] sm:$0xff]
          %v764 = vld [vmem:[#allocation2 + $0x8] sm:$0xff]
          %v765 = vld [vmem:[#allocation2 + $0x10] sm:$0xff]
          %v766 = vld [vmem:[#allocation2 + $0x18] sm:$0xff]
          %v767 = vld [vmem:[#allocation2 + $0x20] sm:$0xff]
          %v768 = vld [vmem:[#allocation2 + $0x28] sm:$0xff]
          %v769 = vld [vmem:[#allocation2 + $0x30] sm:$0xff]
          %v770 = vld [vmem:[#allocation2 + $0x38] sm:$0xff]
          %v771 = vld [vmem:[#allocation2 + $0x40] sm:$0xff]
          %v772 = vld [vmem:[#allocation2 + $0x48] sm:$0xff]
          %v773 = vld [vmem:[#allocation2 + $0x50] sm:$0xff]
          %v774 = vld [vmem:[#allocation2 + $0x58] sm:$0xff]
          %v775 = vld [vmem:[#allocation2 + $0x60] sm:$0xff]
          %v776 = vld [vmem:[#allocation2 + $0x68] sm:$0xff]
          %v777 = vld [vmem:[#allocation2 + $0x70] sm:$0xff]
          %v778 = vld [vmem:[#allocation2 + $0x78] sm:$0xff]
          %v779 = vld [vmem:[#allocation2 + $0x80] sm:$0xff]
          %v780 = vld [vmem:[#allocation2 + $0x88] sm:$0xff]
          %v781 = vld [vmem:[#allocation2 + $0x90] sm:$0xff]
          %v782 = vld [vmem:[#allocation2 + $0x98] sm:$0xff]
          %v783 = vld [vmem:[#allocation2 + $0xa0] sm:$0xff]
          %v784 = vld [vmem:[#allocation2 + $0xa8] sm:$0xff]
          %v785 = vld [vmem:[#allocation2 + $0xb0] sm:$0xff]
          %v786 = vld [vmem:[#allocation2 + $0xb8] sm:$0xff]
          %v787 = vld [vmem:[#allocation2 + $0xc0] sm:$0xff]
          %v788 = vld [vmem:[#allocation2 + $0xc8] sm:$0xff]
          %v789 = vld [vmem:[#allocation2 + $0xd0] sm:$0xff]
          %v790 = vld [vmem:[#allocation2 + $0xd8] sm:$0xff]
          %v791 = vld [vmem:[#allocation2 + $0xe0] sm:$0xff]
          %v792 = vld [vmem:[#allocation2 + $0xe8] sm:$0xff]
          %v793 = vld [vmem:[#allocation2 + $0xf0] sm:$0xff]
          %v794 = vld [vmem:[#allocation2 + $0xf8] sm:$0xff]
          %v795 = vld [vmem:[%s345] sm:$0x1]
          %v797 = vperm.slane %v795, 0
          %v799 = vadd.f32 %v763, %v797
          %v800 = vadd.f32 %v764, %v797
          %v801 = vadd.f32 %v765, %v797
          %v802 = vadd.f32 %v766, %v797
          %v803 = vadd.f32 %v767, %v797
          %v804 = vadd.f32 %v768, %v797
          %v805 = vadd.f32 %v769, %v797
          %v806 = vadd.f32 %v770, %v797
          %v807 = vadd.f32 %v771, %v797
          %v808 = vadd.f32 %v772, %v797
          %v809 = vadd.f32 %v773, %v797
          %v810 = vadd.f32 %v774, %v797
          %v811 = vadd.f32 %v775, %v797
          %v812 = vadd.f32 %v776, %v797
          %v813 = vadd.f32 %v777, %v797
          %v814 = vadd.f32 %v778, %v797
          %v815 = vadd.f32 %v779, %v797
          %v816 = vadd.f32 %v780, %v797
          %v817 = vadd.f32 %v781, %v797
          %v818 = vadd.f32 %v782, %v797
          %v819 = vadd.f32 %v783, %v797
          %v820 = vadd.f32 %v784, %v797
          %v821 = vadd.f32 %v785, %v797
          %v822 = vadd.f32 %v786, %v797
          %v823 = vadd.f32 %v787, %v797
          %v824 = vadd.f32 %v788, %v797
          %v825 = vadd.f32 %v789, %v797
          %v826 = vadd.f32 %v790, %v797
          %v827 = vadd.f32 %v791, %v797
          %v828 = vadd.f32 %v792, %v797
          %v829 = vadd.f32 %v793, %v797
          %v830 = vadd.f32 %v794, %v797
          %831 = vst [vmem:[%s332] sm:$0xff] %v799
          %832 = vst [vmem:[%s332 + $0x8] sm:$0xff] %v800
          %833 = vst [vmem:[%s332 + $0x10] sm:$0xff] %v801
          %834 = vst [vmem:[%s332 + $0x18] sm:$0xff] %v802
          %835 = vst [vmem:[%s332 + $0x20] sm:$0xff] %v803
          %836 = vst [vmem:[%s332 + $0x28] sm:$0xff] %v804
          %837 = vst [vmem:[%s332 + $0x30] sm:$0xff] %v805
          %838 = vst [vmem:[%s332 + $0x38] sm:$0xff] %v806
          %839 = vst [vmem:[%s332 + $0x40] sm:$0xff] %v807
          %840 = vst [vmem:[%s332 + $0x48] sm:$0xff] %v808
          %841 = vst [vmem:[%s332 + $0x50] sm:$0xff] %v809
          %842 = vst [vmem:[%s332 + $0x58] sm:$0xff] %v810
          %843 = vst [vmem:[%s332 + $0x60] sm:$0xff] %v811
          %844 = vst [vmem:[%s332 + $0x68] sm:$0xff] %v812
          %845 = vst [vmem:[%s332 + $0x70] sm:$0xff] %v813
          %846 = vst [vmem:[%s332 + $0x78] sm:$0xff] %v814
          %847 = vst [vmem:[%s332 + $0x80] sm:$0xff] %v815
          %848 = vst [vmem:[%s332 + $0x88] sm:$0xff] %v816
          %849 = vst [vmem:[%s332 + $0x90] sm:$0xff] %v817
          %850 = vst [vmem:[%s332 + $0x98] sm:$0xff] %v818
          %851 = vst [vmem:[%s332 + $0xa0] sm:$0xff] %v819
          %852 = vst [vmem:[%s332 + $0xa8] sm:$0xff] %v820
          %853 = vst [vmem:[%s332 + $0xb0] sm:$0xff] %v821
          %854 = vst [vmem:[%s332 + $0xb8] sm:$0xff] %v822
          %855 = vst [vmem:[%s332 + $0xc0] sm:$0xff] %v823
          %856 = vst [vmem:[%s332 + $0xc8] sm:$0xff] %v824
          %857 = vst [vmem:[%s332 + $0xd0] sm:$0xff] %v825
          %858 = vst [vmem:[%s332 + $0xd8] sm:$0xff] %v826
          %859 = vst [vmem:[%s332 + $0xe0] sm:$0xff] %v827
          %860 = vst [vmem:[%s332 + $0xe8] sm:$0xff] %v828
          %861 = vst [vmem:[%s332 + $0xf0] sm:$0xff] %v829
          %862 = vst [vmem:[%s332 + $0xf8] sm:$0xff] %v830
        $region81: #{conv2d.1} parent=68 // pred_fallthru
          _
        %s863 = sand.u32 %s128, 1
        %s864 = scalar_lea.sflag [#allocation5], %s863
        %s865 = sand.u32 %s128, 1
        %s866 = smul.addr %s865, 256
        %s867 = scalar_lea.vmem [#allocation4], %s866
        // Predicated region
        $region82: #{conv2d.1} parent=68 // pred_check
          %p868 = pneg %p138
        $region83: #{conv2d.1} parent=68 // pred_check_branch
          %870 = sbr.rel (%p868) target = $region85
        $region84: #{conv2d.1} parent=68 // pred_region
          %s871 = smul.u32 32, %s22
          %873 = vsyncadd %s864, 0
          %s874 = smul.addr %s871, 3
          %s875 = sadd.s32 %s23, %s874
          %s876 = smul.addr %s875, 8
          %s877 = scalar_lea.hbm %s3, %s876
          %s878 = sshll.u32 %s867, 4
          %s879 = int_to_ptr.vmem [resolvable:$true] %s878
          %s880 = sshll.u32 %s877, 4
          %s881 = int_to_ptr.hbm [resolvable:$true] %s880
          %886 = dma.vmem_to_hbm [thread:$0]  %s879, 4096, %s881, %s864, 128, 384, 8
        $region85: #{conv2d.1} parent=68 // pred_fallthru
          _
      $region69: #{conv2d.1} parent=5 // pred_fallthru
        _
      %p887 = scmp.le.s32.totalorder 2, %s12
      // Predicated region
      $region86: #{conv2d.1} parent=5 // pred_check
        %p888 = pneg %p887
      $region87: #{conv2d.1} parent=5 // pred_check_branch
        %890 = sbr.rel (%p888) target = $region89
      $region88: #{conv2d.1} parent=5 // pred_region
        %s891 = ssub.s32 %s12, 2
        // Predicated region
        $region90: #{conv2d.1} parent=88 // pred_check
          %p892 = pneg %p144
        $region91: #{conv2d.1} parent=88 // pred_check_branch
          %894 = sbr.rel (%p892) target = $region93
        $region92: #{conv2d.1} parent=88 // pred_region
          %s895 = sand.u32 %s129, 1
          %s896 = scalar_lea.sflag [#allocation5], %s895
          %s897 = sand.u32 %s129, 1
          %s898 = smul.addr %s897, 256
          %s899 = scalar_lea.vmem [#allocation4], %s898
          %901 = dma.done %s896, 4096
        $region93: #{conv2d.1} parent=88 // pred_fallthru
          _
      $region89: #{conv2d.1} parent=5 // pred_fallthru
        _
    $region6: #{conv2d.1} parent=1 // loop_footer
      %s16 = sadd.s32 1, %s12
    $region7: #{conv2d.1} parent=1 // loop_footer_branch
      %11 = sbr.rel target = $region3
    $region8: #{conv2d.1} parent=1 // loop_exit
      _
    %902 = vsyncpa [#allocation5], 1
    %s903 = scalar_lea.sflag [#allocation5], 1
    %904 = vsyncpa %s903, 1

</llo_original>
